<compile_context>
chip_gen: v7x
topology: tpu7x:2x2x1
jax: 0.10.0
libtpu: 0.0.40
codegen_flags: <defaults>
</compile_context>

<pallas_src>
import functools

import jax
import jax.numpy as jnp
import numpy as np
from jax import lax
from jax.experimental import pallas as pl
from jax.experimental.pallas import tpu as pltpu


# ---------------------------------------------------------------------------
# Pallas kernel
# ---------------------------------------------------------------------------
def _layernorm_kernel(x_ref, w_ref, b_ref, o_ref, *, eps, inv_d):
    # x_ref: (TM, D) tile of rows; w_ref/b_ref: (1, D) mixed weight/bias.
    # Param loads/casts happen once per tile; the constant (0,0) index_map
    # keeps the (1, D) blocks resident across grid steps.
    x = x_ref[...].astype(jnp.float32)
    w = w_ref[...].astype(jnp.float32)
    b = b_ref[...].astype(jnp.float32)

    # Two-pass statistics (mean, then centered second moment).  x is already
    # in VMEM and the kernel is HBM-bound, so the second sweep costs nothing
    # and avoids the E[x^2]-mean^2 cancellation (negative var -> NaN rsqrt).
    mean = jnp.sum(x, axis=-1, keepdims=True) * inv_d
    xc = x - mean
    var = jnp.sum(xc * xc, axis=-1, keepdims=True) * inv_d
    inv = lax.rsqrt(var + eps)  # EUP slot, effectively free here.

    o_ref[...] = (xc * inv * w + b).astype(o_ref.dtype)


# ---------------------------------------------------------------------------
# Tiling / VMEM heuristics
# ---------------------------------------------------------------------------
def _vmem_capacity_bytes():
    """Physical VMEM per core; falls back to the smallest (v7x, 64 MiB)."""
    try:
        return int(pltpu.get_tpu_info().vmem_capacity_bytes)
    except Exception:  # not on TPU / API unavailable -> be conservative
        return 64 << 20


def _sublane_align(itemsize):
    """Native sublane packing: 8 rows f32, 16 bf16, 32 int8/fp8."""
    return max(8, 32 // max(int(itemsize), 1))


def _choose_tile_rows(n_rows, d, itemsize):
    """Pick a large, VMEM-safe row tile, sized by bytes.

    Targets ~2 MiB per block buffer (so the ~0.35 us per-grid-step overhead
    is <<1% of the tile's DMA time even on v7x's 3.2 TB/s HBM), stays within
    a generation-aware buffer budget (4 double-buffered in/out tiles plus
    f32 intermediates), keeps >=4 grid steps so both v7x TensorCores get
    pipelined work, and aligns rows to the dtype's sublane packing.
    """
    align = _sublane_align(itemsize)
    if n_rows <= align:
        return n_rows  # block equals full array dim -> always legal

    vmem_cap = _vmem_capacity_bytes()
    # Budget for the 4 double-buffered (in + out) tile buffers: conservative
    # on v7x (64 MiB physical), roomier on v5e/v6e (128 MiB physical).
    buf_budget = (16 << 20) if vmem_cap <= (64 << 20) else (40 << 20)
    # f32 intermediates dominate per-row VMEM cost, hence max(itemsize, 4).
    rows_by_vmem = max(align, buf_budget // (4 * d * max(int(itemsize), 4)))

    # ~2 MiB per block buffer (review: 1-4 MiB hits ~85% of HBM roofline).
    target_block_bytes = 2 << 20
    rows_by_target = max(align, target_block_bytes // (d * int(itemsize)))

    tile = min(rows_by_target, rows_by_vmem, n_rows)
    # Keep >=4 grid steps (>=2 per v7x TensorCore) so i+1 prefetch overlaps i.
    tile = min(tile, max(align, -(-n_rows // 4)))
    tile = max(align, (tile // align) * align)  # sublane packing alignment
    return tile


def pallas_layernorm(x2d, weight, bias, eps, tile_rows=None):
    """x2d: (N, D) float array; weight/bias: (D,). Returns (N, D)."""
    N, D = x2d.shape
    itemsize = jnp.dtype(x2d.dtype).itemsize
    if tile_rows is None:
        tile_rows = _choose_tile_rows(N, D, itemsize)
    grid_rows = -(-N // tile_rows)  # cdiv; last block may be partial

    # Scoped-VMEM estimate: 2x double-buffered (in + out) tiles plus ~3 live
    # f32 tile-sized temps inside the body (x_f32, centered, squared), plus
    # a little headroom for the (1, D) weight/bias blocks and internal
    # scratch.  Cap at ~62% of physical VMEM (≈40 MiB on v7x, ≈80 MiB on
    # v5e/v6e) so Pallas internals / semaphores always fit.
    tile_bytes = tile_rows * D * itemsize
    needed = 4 * tile_bytes + 3 * tile_rows * D * 4 + (1 << 20)
    vmem_cap = _vmem_capacity_bytes()
    vmem_limit = int(min(max(needed, 32 << 20), (vmem_cap * 62) // 100))

    # NOTE: when D < 128 (argmax path with emb 64/96) we intentionally do NOT
    # pad the lane dim to 128 — the kernel is HBM-bandwidth-bound, padding
    # would double bytes moved, and masked stores hide under DMA.
    w2d = weight.reshape(1, D)
    b2d = bias.reshape(1, D)
    kernel = functools.partial(_layernorm_kernel, eps=float(eps),
                               inv_d=float(1.0 / D))
    return pl.pallas_call(
        kernel,
        out_shape=jax.ShapeDtypeStruct((N, D), x2d.dtype),
        grid_spec=pltpu.PrefetchScalarGridSpec(
            num_scalar_prefetch=0,
            grid=(grid_rows,),
            in_specs=[
                pl.BlockSpec((tile_rows, D), lambda i: (i, 0)),
                pl.BlockSpec((1, D), lambda i: (0, 0)),
                pl.BlockSpec((1, D), lambda i: (0, 0)),
            ],
            out_specs=pl.BlockSpec((tile_rows, D), lambda i: (i, 0)),
        ),
        compiler_params=pltpu.CompilerParams(
            dimension_semantics=("parallel",),
            vmem_limit_bytes=vmem_limit),
    )(x2d, w2d, b2d)


# ---------------------------------------------------------------------------
# Parameter-mixture glue (plain JAX / host python, matches the PyTorch module)
# ---------------------------------------------------------------------------
def compute_weight_and_bias_mixture(weights, op_weight, op_bias,
                                    emb_choice_list, use_argmax=False):
    """JAX port of LayerNormMainMixture.compute_weight_and_bias_mixture.

    weights: (num_choices,) mixture coefficients (alphas).
    op_weight / op_bias: (max_emb,) full LayerNorm affine params.
    Soft case: returns zero-padded mixed (weight, bias) of length max_emb.
    Argmax case: returns weights of length emb_choice_list[argmax].
    """
    max_emb = max(emb_choice_list)
    d_idx = jnp.arange(max_emb)
    if use_argmax:
        # Host-side argmax, mirroring the PyTorch `.item()` path.
        # TODO(synk): not jit-traceable (same as the original module's .item()).
        idx = int(np.argmax(np.asarray(weights)))
        emb = emb_choice_list[idx]
        w = weights[idx] * op_weight[:emb]
        b = None if op_bias is None else weights[idx] * op_bias[:emb]
        return w, b
    conv_w = jnp.zeros((max_emb,), op_weight.dtype)
    conv_b = jnp.zeros((max_emb,), op_weight.dtype) if op_bias is not None else None
    for i, emb in enumerate(emb_choice_list):
        mask = (d_idx < emb).astype(op_weight.dtype)
        conv_w = conv_w + weights[i] * op_weight * mask
        if op_bias is not None:
            conv_b = conv_b + weights[i] * op_bias * mask
    return conv_w, conv_b


def layernorm_main_mixture_forward(x, weights, op_weight, op_bias,
                                   emb_choice_list, eps=1e-5, use_argmax=False):
    """Forward pass of LayerNormMainMixture.

    x: (..., D) where D matches the mixed weight length (max_emb for the soft
    mixture, emb_choice_list[argmax] for the argmax path, as in the supernet).
    """
    w, b = compute_weight_and_bias_mixture(
        weights, op_weight, op_bias, emb_choice_list, use_argmax=use_argmax)
    if b is None:
        b = jnp.zeros_like(w)
    D = x.shape[-1]
    assert w.shape[0] == D, "mixed weight length must match x last dim"
    orig_shape = x.shape
    x2d = x.reshape(-1, D)
    out = pallas_layernorm(x2d, w, b, eps)
    return out.reshape(orig_shape)


# ---------------------------------------------------------------------------
# Self-test
# ---------------------------------------------------------------------------
def _ref_layernorm(x, w, b, eps):
    mean = jnp.mean(x, axis=-1, keepdims=True)
    var = jnp.mean((x - mean) ** 2, axis=-1, keepdims=True)
    return (x - mean) / jnp.sqrt(var + eps) * w + b


if __name__ == "__main__":
    key = jax.random.PRNGKey(0)
    k_x, k_w, k_b, k_alpha, k_x2 = jax.random.split(key, 5)

    batch, seq = 2, 8
    emb_choice_list = [64, 96, 128]
    max_emb = max(emb_choice_list)
    eps = 1e-5

    # Deterministic synthetic parameters (nn.LayerNorm(max_emb) analog).
    op_weight = 1.0 + 0.05 * jax.random.normal(k_w, (max_emb,), jnp.float32)
    op_bias = 0.05 * jax.random.normal(k_b, (max_emb,), jnp.float32)

    # Mixture coefficients (softmax over arch weights).
    alphas = jax.nn.softmax(jax.random.normal(k_alpha, (len(emb_choice_list),)))

    # --- soft-mixture path (primary) --------------------------------------
    x = jax.random.normal(k_x, (batch, seq, max_emb), jnp.float32)
    out = layernorm_main_mixture_forward(
        x, alphas, op_weight, op_bias, emb_choice_list, eps=eps, use_argmax=False)
    jax.block_until_ready(out)

    w_mix, b_mix = compute_weight_and_bias_mixture(
        alphas, op_weight, op_bias, emb_choice_list, use_argmax=False)
    ref = _ref_layernorm(x, w_mix, b_mix, eps)
    assert jnp.max(jnp.abs(out - ref)) < 1e-4, "soft-mixture mismatch vs reference"

    # --- large mean offset (exercises the two-pass variance stability) -----
    x_off = x + 100.0
    out_off = layernorm_main_mixture_forward(
        x_off, alphas, op_weight, op_bias, emb_choice_list, eps=eps)
    jax.block_until_ready(out_off)
    ref_off = _ref_layernorm(x_off, w_mix, b_mix, eps)
    assert bool(jnp.all(jnp.isfinite(out_off))), "NaN/inf with large mean offset"
    assert jnp.max(jnp.abs(out_off - ref_off)) < 1e-3, "offset-mean mismatch"

    # --- ragged row count (exercises cdiv grid / partial last block) -------
    x_rag = jax.random.normal(k_x2, (3, 5, max_emb), jnp.float32)  # N=15 rows
    out_rag = layernorm_main_mixture_forward(
        x_rag, alphas, op_weight, op_bias, emb_choice_list, eps=eps)
    jax.block_until_ready(out_rag)
    ref_rag = _ref_layernorm(x_rag, w_mix, b_mix, eps)
    assert jnp.max(jnp.abs(out_rag - ref_rag)) < 1e-4, "ragged-N mismatch"

    # --- argmax path (x already sliced to the chosen emb, as in the supernet)
    idx = int(np.argmax(np.asarray(alphas)))
    emb = emb_choice_list[idx]
    x_arg = x[..., :emb]
    out_arg = layernorm_main_mixture_forward(
        x_arg, alphas, op_weight, op_bias, emb_choice_list, eps=eps,
        use_argmax=True)
    jax.block_until_ready(out_arg)
    ref_arg = _ref_layernorm(x_arg, alphas[idx] * op_weight[:emb],
                             alphas[idx] * op_bias[:emb], eps)
    assert jnp.max(jnp.abs(out_arg - ref_arg)) < 1e-4, "argmax-path mismatch"

    print("KERNEL_OK")
</pallas_src>

<mosaic_0001>
module attributes {stable_mosaic.version = 11 : i64} {
  func.func @_layernorm_kernel(%arg0: i32, %arg1: memref<8x128xf32, #tpu.memory_space<vmem>>, %arg2: memref<1x128xf32, #tpu.memory_space<vmem>>, %arg3: memref<1x128xf32, #tpu.memory_space<vmem>>, %arg4: memref<8x128xf32, #tpu.memory_space<vmem>>) attributes {dimension_semantics = [#tpu.dimension_semantics<parallel>], iteration_bounds = array<i64: 2>, scalar_prefetch = 0 : i64, scratch_operands = 0 : i64, tpu.core_type = #tpu.core_type<tc>, window_params = [{transform_indices = @transform_0, window_bounds = array<i64: 8, 128>}, {pipeline_mode = #tpu.pipeline_mode<synchronous>, transform_indices = @transform_1, window_bounds = array<i64: 1, 128>}, {pipeline_mode = #tpu.pipeline_mode<synchronous>, transform_indices = @transform_2, window_bounds = array<i64: 1, 128>}, {transform_indices = @transform_3, window_bounds = array<i64: 8, 128>}]} {
    %c0 = arith.constant 0 : index
    %c0_0 = arith.constant 0 : index
    %0 = vector.load %arg1[%c0, %c0_0] : memref<8x128xf32, #tpu.memory_space<vmem>>, vector<8x128xf32>
    %c0_1 = arith.constant 0 : index
    %c0_2 = arith.constant 0 : index
    %1 = vector.load %arg2[%c0_1, %c0_2] : memref<1x128xf32, #tpu.memory_space<vmem>>, vector<1x128xf32>
    %c0_3 = arith.constant 0 : index
    %c0_4 = arith.constant 0 : index
    %2 = vector.load %arg3[%c0_3, %c0_4] : memref<1x128xf32, #tpu.memory_space<vmem>>, vector<1x128xf32>
    %cst = arith.constant dense<0.000000e+00> : vector<8xf32>
    %3 = vector.multi_reduction <add>, %0, %cst [1] : vector<8x128xf32> to vector<8xf32>
    %4 = vector.shape_cast %3 : vector<8xf32> to vector<8x1xf32>
    %cst_5 = arith.constant 7.812500e-03 : f32
    %5 = vector.broadcast %cst_5 : f32 to vector<8x1xf32>
    %6 = arith.mulf %4, %5 : vector<8x1xf32>
    %7 = vector.broadcast %6 : vector<8x1xf32> to vector<8x128xf32>
    %8 = arith.subf %0, %7 : vector<8x128xf32>
    %9 = arith.mulf %8, %8 : vector<8x128xf32>
    %cst_6 = arith.constant dense<0.000000e+00> : vector<8xf32>
    %10 = vector.multi_reduction <add>, %9, %cst_6 [1] : vector<8x128xf32> to vector<8xf32>
    %11 = vector.shape_cast %10 : vector<8xf32> to vector<8x1xf32>
    %cst_7 = arith.constant 7.812500e-03 : f32
    %12 = vector.broadcast %cst_7 : f32 to vector<8x1xf32>
    %13 = arith.mulf %11, %12 : vector<8x1xf32>
    %cst_8 = arith.constant 9.99999974E-6 : f32
    %14 = vector.broadcast %cst_8 : f32 to vector<8x1xf32>
    %15 = arith.addf %13, %14 : vector<8x1xf32>
    %16 = math.rsqrt %15 : vector<8x1xf32>
    %17 = vector.broadcast %16 : vector<8x1xf32> to vector<8x128xf32>
    %18 = arith.mulf %8, %17 : vector<8x128xf32>
    %19 = vector.broadcast %1 : vector<1x128xf32> to vector<8x128xf32>
    %20 = arith.mulf %18, %19 : vector<8x128xf32>
    %21 = vector.broadcast %2 : vector<1x128xf32> to vector<8x128xf32>
    %22 = arith.addf %20, %21 : vector<8x128xf32>
    %c0_9 = arith.constant 0 : index
    %c0_10 = arith.constant 0 : index
    %23 = vector.load %arg4[%c0_9, %c0_10] : memref<8x128xf32, #tpu.memory_space<vmem>>, vector<8x128xf32>
    tpu.vector_store %arg4[%c0_9, %c0_10], %22 {strides = array<i32>} : memref<8x128xf32, #tpu.memory_space<vmem>>, vector<8x128xf32>,
    return
  }
  func.func @transform_0(%arg0: i32) -> (i32, i32) {
    %c0_i32 = arith.constant 0 : i32
    %c0_i32_0 = arith.constant 0 : i32
    return %arg0, %c0_i32 : i32, i32
  }
  func.func @transform_1(%arg0: i32) -> (i32, i32) {
    %c0_i32 = arith.constant 0 : i32
    %c0_i32_0 = arith.constant 0 : i32
    %c0_i32_1 = arith.constant 0 : i32
    return %c0_i32, %c0_i32_0 : i32, i32
  }
  func.func @transform_2(%arg0: i32) -> (i32, i32) {
    %c0_i32 = arith.constant 0 : i32
    %c0_i32_0 = arith.constant 0 : i32
    %c0_i32_1 = arith.constant 0 : i32
    return %c0_i32, %c0_i32_0 : i32, i32
  }
  func.func @transform_3(%arg0: i32) -> (i32, i32) {
    %c0_i32 = arith.constant 0 : i32
    %c0_i32_0 = arith.constant 0 : i32
    return %arg0, %c0_i32 : i32, i32
  }
}

</mosaic_0001>

<llo_original>
// kernel: tpu_custom_call.1
$region0: #{tpu_custom_call.1}
  #allocation0 [shape = 'u32[]', space=smem, size = 0x4, offset = 0x4, fixed_abs, tag = 'smem constant byte address 0x4 - core index']
  #allocation1 [shape = 'u32[144,128]{1,0:T(1,128)}', space=vmem, size = 0x12000, scoped, tag = 'internal scratch']
  %s0 = inlined_call_operand.hbm [shape: f32[16,128], index: 0, kind: input, shape index: {}]
  %s1 = inlined_call_operand.vmem [shape: f32[1,128], index: 1, kind: input, shape index: {}]
  %s2 = inlined_call_operand.vmem [shape: f32[1,128], index: 2, kind: input, shape index: {}]
  %s3 = inlined_call_operand.hbm [shape: f32[16,128], index: 3, kind: output, shape index: {}]
  %s4 = sld [smem:[#allocation0]]
  $region49: #{tpu_custom_call.1} parent=0
    _
  %s6 = ssub.s32 1, %s4
  %s7 = scalar_select 0, %s6, %s4
  $region1: #{tpu_custom_call.1} parent=0
    #allocation2 [shape = 'u8[8192]{0}', space=vmem, size = 0x2000, scoped, tag = 'input window, operand 0']
    #allocation3 [shape = 's32[2]{0}', space=sflag, size = 0x8, scoped, tag = 'scoped memory for tpu_custom_call.1']
    #allocation4 [shape = 's32[2]{0}', space=sflag, size = 0x8, scoped, tag = 'scoped memory for tpu_custom_call.1']
    #allocation5 [shape = 'u8[8192]{0}', space=vmem, size = 0x2000, scoped, tag = 'output window, operand 0']
    %8 = vsyncpa [#allocation3], 0
    %s9 = scalar_lea.sflag [#allocation3], 1
    %10 = vsyncpa %s9, 0
    %11 = vsyncpa [#allocation4], 0
    %s12 = scalar_lea.sflag [#allocation4], 1
    %13 = vsyncpa %s12, 0
    loop: start=0, step=1, limit=4
    $region2: #{tpu_custom_call.1} parent=1 // loop_pre_header
      _
    $region3: #{tpu_custom_call.1} parent=1 // loop_header
      %s15 = sphi 0, %s19
      %p16 = scmp.ge.s32.totalorder %s15, 4
      %s25 = sphi 0, %s27
      %s28 = sphi 0, %s25
      %s29 = sphi 0, %s28
      %s45 = sphi 0, %s29
      %s49 = sphi 0, %s49
      %s51 = sphi 0, %s49
      %s52 = sphi 0, %s51
      %s66 = sphi 0, %s52
      %s70 = sphi 0, %s70
      %s72 = sphi 0, %s70
      %s73 = sphi 0, %s72
      %s87 = sphi 0, %s73
      %s93 = sphi 0, %s95
      %s96 = sphi 0, %s93
      %s97 = sphi 0, %s96
      %s113 = sphi 0, %s97
    $region4: #{tpu_custom_call.1} parent=1 // loop_header_branch
      %18 = sbr.rel (%p16) target = $region8
    $region5: #{tpu_custom_call.1} parent=1 // loop_body
      %s20 = ssub.s32 %s15, 1
      %s21 = ssub.s32 %s15, 2
      %s22 = sadd.s32 %s15, 1
      %s23 = ssub.s32 %s15, %s22
      %p24 = scmp.eq.s32.totalorder %s23, 0
      %s26 = sadd.s32 %s25, 1
      %s27 = scalar_select %p24, %s25, %s26
      %p30 = pneg %p24
      %p31 = scmp.eq.s32.totalorder %s15, 1
      %p32 = por %p30, %p31
      %p33 = scmp.ne.s32.totalorder %s25, %s28
      %p34 = scmp.eq.s32.totalorder %s15, 0
      %p35 = por %p33, %p34
      %p36 = scmp.ne.s32.totalorder %s25, %s28
      %p37 = scmp.eq.s32.totalorder %s20, 1
      %p38 = por %p36, %p37
      %p39 = scmp.ne.s32.totalorder %s28, %s29
      %p40 = scmp.eq.s32.totalorder %s20, 0
      %p41 = por %p39, %p40
      %p42 = scmp.ne.s32.totalorder %s28, %s29
      %p43 = scmp.eq.s32.totalorder %s21, 1
      %p44 = por %p42, %p43
      %p46 = scmp.ne.s32.totalorder %s29, %s45
      %p47 = scmp.eq.s32.totalorder %s21, 0
      %p48 = por %p46, %p47
      %s50 = sadd.s32 %s49, 1
      %p53 = scmp.eq.s32.totalorder %s15, 1
      %p54 = scmp.ne.s32.totalorder %s49, %s51
      %p55 = scmp.eq.s32.totalorder %s15, 0
      %p56 = por %p54, %p55
      %p57 = scmp.ne.s32.totalorder %s49, %s51
      %p58 = scmp.eq.s32.totalorder %s20, 1
      %p59 = por %p57, %p58
      %p60 = scmp.ne.s32.totalorder %s51, %s52
      %p61 = scmp.eq.s32.totalorder %s20, 0
      %p62 = por %p60, %p61
      %p63 = scmp.ne.s32.totalorder %s51, %s52
      %p64 = scmp.eq.s32.totalorder %s21, 1
      %p65 = por %p63, %p64
      %p67 = scmp.ne.s32.totalorder %s52, %s66
      %p68 = scmp.eq.s32.totalorder %s21, 0
      %p69 = por %p67, %p68
      %s71 = sadd.s32 %s70, 1
      %p74 = scmp.eq.s32.totalorder %s15, 1
      %p75 = scmp.ne.s32.totalorder %s70, %s72
      %p76 = scmp.eq.s32.totalorder %s15, 0
      %p77 = por %p75, %p76
      %p78 = scmp.ne.s32.totalorder %s70, %s72
      %p79 = scmp.eq.s32.totalorder %s20, 1
      %p80 = por %p78, %p79
      %p81 = scmp.ne.s32.totalorder %s72, %s73
      %p82 = scmp.eq.s32.totalorder %s20, 0
      %p83 = por %p81, %p82
      %p84 = scmp.ne.s32.totalorder %s72, %s73
      %p85 = scmp.eq.s32.totalorder %s21, 1
      %p86 = por %p84, %p85
      %p88 = scmp.ne.s32.totalorder %s73, %s87
      %p89 = scmp.eq.s32.totalorder %s21, 0
      %p90 = por %p88, %p89
      %s91 = ssub.s32 %s15, %s22
      %p92 = scmp.eq.s32.totalorder %s91, 0
      %s94 = sadd.s32 %s93, 1
      %s95 = scalar_select %p92, %s93, %s94
      %p98 = pneg %p92
      %p99 = scmp.eq.s32.totalorder %s15, 1
      %p100 = por %p98, %p99
      %p101 = scmp.ne.s32.totalorder %s93, %s96
      %p102 = scmp.eq.s32.totalorder %s15, 0
      %p103 = por %p101, %p102
      %p104 = scmp.ne.s32.totalorder %s93, %s96
      %p105 = scmp.eq.s32.totalorder %s20, 1
      %p106 = por %p104, %p105
      %p107 = scmp.ne.s32.totalorder %s96, %s97
      %p108 = scmp.eq.s32.totalorder %s20, 0
      %p109 = por %p107, %p108
      %p110 = scmp.ne.s32.totalorder %s96, %s97
      %p111 = scmp.eq.s32.totalorder %s21, 1
      %p112 = por %p110, %p111
      %p114 = scmp.ne.s32.totalorder %s97, %s113
      %p115 = scmp.eq.s32.totalorder %s21, 0
      %p116 = por %p114, %p115
      %p117 = scmp.le.s32.totalorder 1, %s15
      %p118 = scmp.lt.s32.totalorder %s15, 3
      %p119 = pnand %p117, %p118
      %p120 = pneg %p119
      // Predicated region
      $region9: #{tpu_custom_call.1} parent=5 // pred_check
        _
      $region10: #{tpu_custom_call.1} parent=5 // pred_check_branch
        %122 = sbr.rel (%p119) target = $region12
      $region11: #{tpu_custom_call.1} parent=5 // pred_region
        %s123 = ssub.s32 %s15, 1
        // Predicated region
        $region13: #{tpu_custom_call.1} parent=11 // pred_check
          %p124 = pneg %p62
        $region14: #{tpu_custom_call.1} parent=11 // pred_check_branch
          %126 = sbr.rel (%p124) target = $region16
        $region15: #{tpu_custom_call.1} parent=11 // pred_region
          _
        $region16: #{tpu_custom_call.1} parent=11 // pred_fallthru
          _
        // Predicated region
        $region17: #{tpu_custom_call.1} parent=11 // pred_check
          %p127 = pneg %p83
        $region18: #{tpu_custom_call.1} parent=11 // pred_check_branch
          %129 = sbr.rel (%p127) target = $region20
        $region19: #{tpu_custom_call.1} parent=11 // pred_region
          _
        $region20: #{tpu_custom_call.1} parent=11 // pred_fallthru
          _
      $region12: #{tpu_custom_call.1} parent=5 // pred_fallthru
        _
      %p130 = scmp.lt.s32.totalorder %s15, 2
      // Predicated region
      $region21: #{tpu_custom_call.1} parent=5 // pred_check
        %p131 = pneg %p130
      $region22: #{tpu_custom_call.1} parent=5 // pred_check_branch
        %133 = sbr.rel (%p131) target = $region24
      $region23: #{tpu_custom_call.1} parent=5 // pred_region
        // Predicated region
        $region25: #{tpu_custom_call.1} parent=23 // pred_check
          %p134 = pneg %p35
        $region26: #{tpu_custom_call.1} parent=23 // pred_check_branch
          %136 = sbr.rel (%p134) target = $region28
        $region27: #{tpu_custom_call.1} parent=23 // pred_region
          %s137 = sand.u32 %s25, 1
          %s138 = scalar_lea.sflag [#allocation3], %s137
          %s139 = sand.u32 %s25, 1
          %s140 = smul.addr %s139, 8
          %s141 = scalar_lea.vmem [#allocation2], %s140
          %s143 = ssub.s32 128, 128
          %144 = vsyncadd %s138, %s143
          %s145 = smul.addr %s15, 128
          %s146 = scalar_lea.hbm %s0, %s145
          %s148 = sshll.u32 %s141, 4
          %s149 = int_to_ptr.vmem [resolvable:$true] %s148
          %151 = dma.hbm_to_vmem [thread:$0]  %s146, 128, %s149, %s138
        $region28: #{tpu_custom_call.1} parent=23 // pred_fallthru
          _
      $region24: #{tpu_custom_call.1} parent=5 // pred_fallthru
        _
      %p152 = scmp.le.s32.totalorder 1, %s15
      %p153 = scmp.lt.s32.totalorder %s15, 3
      %p154 = pnand %p152, %p153
      %p155 = pneg %p154
      // Predicated region
      $region29: #{tpu_custom_call.1} parent=5 // pred_check
        _
      $region30: #{tpu_custom_call.1} parent=5 // pred_check_branch
        %157 = sbr.rel (%p154) target = $region32
      $region31: #{tpu_custom_call.1} parent=5 // pred_region
        %s158 = ssub.s32 %s15, 1
        %s159 = sand.u32 %s28, 1
        %s160 = scalar_lea.sflag [#allocation3], %s159
        %s161 = sand.u32 %s28, 1
        %s162 = smul.addr %s161, 8
        %s163 = scalar_lea.vmem [#allocation2], %s162
        // Predicated region
        $region33: #{tpu_custom_call.1} parent=31 // pred_check
          %p164 = pneg %p41
        $region34: #{tpu_custom_call.1} parent=31 // pred_check_branch
          %166 = sbr.rel (%p164) target = $region36
        $region35: #{tpu_custom_call.1} parent=31 // pred_region
          %167 = dma.done %s160, 128
        $region36: #{tpu_custom_call.1} parent=31 // pred_fallthru
          _
        %s168 = sand.u32 %s28, 1
        %s169 = scalar_lea.sflag [#allocation3], %s168
        %s170 = sand.u32 %s28, 1
        %s171 = smul.addr %s170, 8
        %s172 = scalar_lea.vmem [#allocation2], %s171
        %p173 = pneg %p41
        %p174 = pneg %p38
        %p175 = pneg %p62
        %p176 = pneg %p59
        %p177 = pneg %p83
        %p178 = pneg %p80
        %p179 = pneg %p109
        %p180 = pneg %p106
        %s181 = sand.u32 %s96, 1
        %s182 = scalar_lea.sflag [#allocation4], %s181
        %s183 = sand.u32 %s96, 1
        %s184 = smul.addr %s183, 8
        %s185 = scalar_lea.vmem [#allocation5], %s184
        %v186 = vld [vmem:[%s163] sm:$0xff]
        %v187 = vld [vmem:[%s1] sm:$0x1]
        %v188 = vld [vmem:[%s2] sm:$0x1]
        %189 = vadd.xlane.f32.xlu0 %v186
        %v190 = vpop.xlane.xlu0 %189
        %v191 = vmul.f32 %v190, 0.0078125
        %v192 = vsub.f32 %v186, %v191
        %v193 = vmul.f32 %v192, %v192
        %194 = vadd.xlane.f32.xlu0 %v193
        %v195 = vpop.xlane.xlu0 %194
        %v196 = vmul.f32 %v195, 0.0078125
        %v197 = vadd.f32 %v196, 1e-05
        %v198 = vrsqrt.pop %v197
        %v199 = vmul.f32 %v192, %v198
        %v201 = vlaneseq
        %v202 = vshrl.u32 %v201, 7
        %v203 = vsub.s32 0, %v202
        %v204 = vrot.slane %v187, %v203
        %v206 = vmul.f32 %v199, %v204
        %v208 = vlaneseq
        %v209 = vshrl.u32 %v208, 7
        %v210 = vsub.s32 0, %v209
        %v211 = vrot.slane %v188, %v210
        %v213 = vadd.f32 %v206, %v211
        %214 = vst [vmem:[%s185] sm:$0xff] %v213
        %s215 = sand.u32 %s96, 1
        %s216 = scalar_lea.sflag [#allocation4], %s215
        %s217 = sand.u32 %s96, 1
        %s218 = smul.addr %s217, 8
        %s219 = scalar_lea.vmem [#allocation5], %s218
        // Predicated region
        $region37: #{tpu_custom_call.1} parent=31 // pred_check
          %p220 = pneg %p106
        $region38: #{tpu_custom_call.1} parent=31 // pred_check_branch
          %222 = sbr.rel (%p220) target = $region40
        $region39: #{tpu_custom_call.1} parent=31 // pred_region
          %s224 = ssub.s32 128, 128
          %225 = vsyncadd %s216, %s224
          %s226 = smul.addr %s20, 128
          %s227 = scalar_lea.hbm %s3, %s226
          %s229 = sshll.u32 %s219, 4
          %s230 = int_to_ptr.vmem [resolvable:$true] %s229
          %232 = dma.vmem_to_hbm [thread:$0]  %s230, 128, %s227, %s216
        $region40: #{tpu_custom_call.1} parent=31 // pred_fallthru
          _
      $region32: #{tpu_custom_call.1} parent=5 // pred_fallthru
        _
      %p233 = scmp.le.s32.totalorder 2, %s15
      // Predicated region
      $region41: #{tpu_custom_call.1} parent=5 // pred_check
        %p234 = pneg %p233
      $region42: #{tpu_custom_call.1} parent=5 // pred_check_branch
        %236 = sbr.rel (%p234) target = $region44
      $region43: #{tpu_custom_call.1} parent=5 // pred_region
        %s237 = ssub.s32 %s15, 2
        // Predicated region
        $region45: #{tpu_custom_call.1} parent=43 // pred_check
          %p238 = pneg %p112
        $region46: #{tpu_custom_call.1} parent=43 // pred_check_branch
          %240 = sbr.rel (%p238) target = $region48
        $region47: #{tpu_custom_call.1} parent=43 // pred_region
          %s241 = sand.u32 %s97, 1
          %s242 = scalar_lea.sflag [#allocation4], %s241
          %s243 = sand.u32 %s97, 1
          %s244 = smul.addr %s243, 8
          %s245 = scalar_lea.vmem [#allocation5], %s244
          %246 = dma.done %s242, 128
        $region48: #{tpu_custom_call.1} parent=43 // pred_fallthru
          _
      $region44: #{tpu_custom_call.1} parent=5 // pred_fallthru
        _
    $region6: #{tpu_custom_call.1} parent=1 // loop_footer
      %s19 = sadd.s32 1, %s15
    $region7: #{tpu_custom_call.1} parent=1 // loop_footer_branch
      %14 = sbr.rel target = $region3
    $region8: #{tpu_custom_call.1} parent=1 // loop_exit
      _
    %247 = vsyncpa [#allocation3], 1
    %s248 = scalar_lea.sflag [#allocation3], 1
    %249 = vsyncpa %s248, 1
    %250 = vsyncpa [#allocation4], 1
    %s251 = scalar_lea.sflag [#allocation4], 1
    %252 = vsyncpa %s251, 1

</llo_original>
